<compile_context>
chip_gen: v7x
topology: tpu7x:2x2x1
jax: 0.10.0
libtpu: 0.0.40
codegen_flags: <defaults>
</compile_context>

<pallas_src>
import math
import functools

import jax
import jax.numpy as jnp
from jax.experimental import pallas as pl
from jax.experimental.pallas import tpu as pltpu

# small config consistent with the module
H = 4          # number of heads
D_MODEL = 32   # model dim
B = 2          # batch
S = 8          # sequence length


def _mha_kernel(q_ref, k_ref, v_ref, w_ref, b_ref, o_ref, *, h):
    b, s, d = q_ref.shape
    dk = d // h
    n = b * s

    w = w_ref[...]        # (D, 4D) bf16 : [Wq/sqrt(dk) | Wk | Wv | Wo]
    bias = b_ref[...]     # (1, 4D) f32  : [bq/sqrt(dk) | bk | bv | bo]

    # ---- fused Q/K/V projection: one MXU issue for all three inputs. ----
    # (B,S,D)->(B*S,D) reshapes are layout-free; row-stack -> (3*B*S, D).
    x = jnp.concatenate(
        [q_ref[...].reshape(n, d),
         k_ref[...].reshape(n, d),
         v_ref[...].reshape(n, d)], axis=0).astype(jnp.bfloat16)          # (3n, D)
    proj = jnp.dot(x, w, preferred_element_type=jnp.float32)              # (3n, 4D)
    q = (proj[0:n,         0:d]         + bias[:, 0:d]).reshape(b, s, d)  # pre-scaled
    k = (proj[n:2 * n,     d:2 * d]     + bias[:, d:2 * d]).reshape(b, s, d)
    v = (proj[2 * n:3 * n, 2 * d:3 * d] + bias[:, 2 * d:3 * d]).reshape(b, s, d)

    # ---- head-batched attention: fold heads into the einsum batch axis. ----
    qh = jnp.concatenate([q[:, :, i * dk:(i + 1) * dk] for i in range(h)],
                         axis=0).astype(jnp.bfloat16)                     # (h*b, s, dk)
    kh = jnp.concatenate([k[:, :, i * dk:(i + 1) * dk] for i in range(h)],
                         axis=0).astype(jnp.bfloat16)                     # (h*b, s, dk)
    # V stays full-width but masked to head i's lane band, so the context einsum
    # writes each head's output straight into its final lanes (no lane concat).
    lane = jax.lax.broadcasted_iota(jnp.int32, (1, 1, d), 2)
    vh = jnp.concatenate(
        [jnp.where((lane >= i * dk) & (lane < (i + 1) * dk), v, 0.0)
         for i in range(h)], axis=0).astype(jnp.bfloat16)                 # (h*b, s, d)

    # scale 1/sqrt(dk) already folded into Wq/bq at packing time.
    scores = jnp.einsum('bqd,bkd->bqk', qh, kh,
                        preferred_element_type=jnp.float32)               # (h*b, s, s)
    scores = scores - jnp.max(scores, axis=-1, keepdims=True)
    p = jnp.exp(scores)
    p = p * pl.reciprocal(jnp.sum(p, axis=-1, keepdims=True), approx=True)
    # Dropout(p_atten) is identity in eval / inference mode.

    ctx = jnp.einsum('bqk,bkd->bqd', p.astype(jnp.bfloat16), vh,
                     preferred_element_type=jnp.float32)                  # (h*b, s, d)
    # Heads occupy disjoint lane bands -> summing over the head axis == concat.
    ctx = ctx.reshape(h, n, d).sum(axis=0)                                # (B*S, D)

    out = jnp.dot(ctx.astype(jnp.bfloat16), w[:, 3 * d:4 * d],
                  preferred_element_type=jnp.float32) + bias[:, 3 * d:4 * d]
    o_ref[...] = out.reshape(b, s, d)


def multihead_attention(query, key, value, w_packed, b_packed, *, h=H):
    """query/key/value: (B, S, D) float32. w_packed/b_packed from pack_params()."""
    b, s, d = query.shape
    vmem = pl.BlockSpec(memory_space=pltpu.MemorySpace.VMEM)
    return pl.pallas_call(
        functools.partial(_mha_kernel, h=h),
        out_shape=jax.ShapeDtypeStruct((b, s, d), jnp.float32),
        in_specs=[vmem] * 5,
        out_specs=vmem,
        # TODO(synk): at production sizes add grid=(num_q_tiles,) with
        # dimension_semantics=("parallel",) so v7x's second TensorCore is used,
        # and stream K/V blocks; at B=2,S=8 a grid only adds per-step overhead.
    )(query, key, value, w_packed, b_packed)


# ---------------- parameter setup (matches nn.Linear default init) ----------------

def linear_params(key, fan_in, fan_out):
    kw, kb = jax.random.split(key)
    bound = 1.0 / math.sqrt(fan_in)
    # stored pre-transposed (in_features, out_features) so y = x @ W + b
    w = jax.random.uniform(kw, (fan_in, fan_out), jnp.float32, -bound, bound)
    b = jax.random.uniform(kb, (1, fan_out), jnp.float32, -bound, bound)
    return w, b


def pack_params(params, h):
    """One-time packing (init-time constant folding, not per call):
    fold 1/sqrt(d_k) into Wq/bq and concat the four linear layers into a single
    lane-dense (D, 4D) bf16 weight plus a (1, 4D) f32 bias."""
    d = params["wq"].shape[0]
    scale = 1.0 / math.sqrt(d // h)
    w_packed = jnp.concatenate(
        [params["wq"] * scale, params["wk"], params["wv"], params["wo"]],
        axis=1).astype(jnp.bfloat16)                                   # (D, 4D)
    b_packed = jnp.concatenate(
        [params["bq"] * scale, params["bk"], params["bv"], params["bo"]],
        axis=1)                                                        # (1, 4D) f32
    return w_packed, b_packed


# ---------------- pure-JAX f32 reference (mirrors the PyTorch module) ----------------

def mha_reference(query, key, value, params, h):
    b, s, d = query.shape
    dk = d // h

    def proj(x, w, bias):
        return (x @ w + bias).reshape(b, s, h, dk).transpose(0, 2, 1, 3)  # (B, h, S, dk)

    q = proj(query, params["wq"], params["bq"])
    k = proj(key, params["wk"], params["bk"])
    v = proj(value, params["wv"], params["bv"])
    scores = jnp.einsum('bhqd,bhkd->bhqk', q, k) / math.sqrt(dk)
    p = jax.nn.softmax(scores, axis=-1)
    ctx = jnp.einsum('bhqk,bhkd->bhqd', p, v)
    ctx = ctx.transpose(0, 2, 1, 3).reshape(b, s, d)
    return ctx @ params["wo"] + params["bo"]


if __name__ == "__main__":
    root = jax.random.PRNGKey(0)
    kq, kk, kv, kp = jax.random.split(root, 4)
    pkeys = jax.random.split(kp, 4)

    params = {}
    params["wq"], params["bq"] = linear_params(pkeys[0], D_MODEL, D_MODEL)
    params["wk"], params["bk"] = linear_params(pkeys[1], D_MODEL, D_MODEL)
    params["wv"], params["bv"] = linear_params(pkeys[2], D_MODEL, D_MODEL)
    params["wo"], params["bo"] = linear_params(pkeys[3], D_MODEL, D_MODEL)

    w_packed, b_packed = pack_params(params, H)   # one-time init-time packing

    query = jax.random.normal(kq, (B, S, D_MODEL), jnp.float32)
    key_in = jax.random.normal(kk, (B, S, D_MODEL), jnp.float32)
    value = jax.random.normal(kv, (B, S, D_MODEL), jnp.float32)

    out = multihead_attention(query, key_in, value, w_packed, b_packed)
    out = jax.block_until_ready(out)
    assert out.shape == (B, S, D_MODEL) and out.dtype == jnp.float32

    ref = mha_reference(query, key_in, value, params, H)
    # Tolerance reflects bf16 MXU operands (per perf review); f32 reference.
    assert jnp.allclose(out, ref, atol=3e-2, rtol=3e-2), float(jnp.max(jnp.abs(out - ref)))

    print("KERNEL_OK")
</pallas_src>

<mosaic_0001>
module attributes {stable_mosaic.version = 11 : i64} {
  func.func @_mha_kernel(%arg0: memref<2x8x32xf32, #tpu.memory_space<vmem>>, %arg1: memref<2x8x32xf32, #tpu.memory_space<vmem>>, %arg2: memref<2x8x32xf32, #tpu.memory_space<vmem>>, %arg3: memref<32x128xbf16, #tpu.memory_space<vmem>>, %arg4: memref<1x128xf32, #tpu.memory_space<vmem>>, %arg5: memref<2x8x32xf32, #tpu.memory_space<vmem>>) attributes {dimension_semantics = [], scalar_prefetch = 0 : i64, scratch_operands = 0 : i64, tpu.core_type = #tpu.core_type<tc>} {
    %c0 = arith.constant 0 : index
    %c0_0 = arith.constant 0 : index
    %0 = vector.load %arg3[%c0, %c0_0] : memref<32x128xbf16, #tpu.memory_space<vmem>>, vector<32x128xbf16>
    %c0_1 = arith.constant 0 : index
    %c0_2 = arith.constant 0 : index
    %1 = vector.load %arg4[%c0_1, %c0_2] : memref<1x128xf32, #tpu.memory_space<vmem>>, vector<1x128xf32>
    %c0_3 = arith.constant 0 : index
    %c0_4 = arith.constant 0 : index
    %c0_5 = arith.constant 0 : index
    %2 = vector.load %arg0[%c0_3, %c0_4, %c0_5] : memref<2x8x32xf32, #tpu.memory_space<vmem>>, vector<2x8x32xf32>
    %3 = vector.shape_cast %2 : vector<2x8x32xf32> to vector<16x32xf32>
    %c0_6 = arith.constant 0 : index
    %c0_7 = arith.constant 0 : index
    %c0_8 = arith.constant 0 : index
    %4 = vector.load %arg1[%c0_6, %c0_7, %c0_8] : memref<2x8x32xf32, #tpu.memory_space<vmem>>, vector<2x8x32xf32>
    %5 = vector.shape_cast %4 : vector<2x8x32xf32> to vector<16x32xf32>
    %c0_9 = arith.constant 0 : index
    %c0_10 = arith.constant 0 : index
    %c0_11 = arith.constant 0 : index
    %6 = vector.load %arg2[%c0_9, %c0_10, %c0_11] : memref<2x8x32xf32, #tpu.memory_space<vmem>>, vector<2x8x32xf32>
    %7 = vector.shape_cast %6 : vector<2x8x32xf32> to vector<16x32xf32>
    %8 = tpu.concatenate %3, %5, %7 in 0 : vector<16x32xf32>, vector<16x32xf32>, vector<16x32xf32> -> vector<48x32xf32>
    %9 = arith.truncf %8 : vector<48x32xf32> to vector<48x32xbf16>
    %cst = arith.constant dense<0.000000e+00> : vector<48x128xf32>
    %10 = tpu.matmul %9, %0, %cst {dimension_numbers = #tpu.dot_dimension_numbers<[1], [0], [0], [1], [0, 0, 1, 1], [], []>} : vector<48x32xbf16>, vector<32x128xbf16>, vector<48x128xf32> -> vector<48x128xf32>
    %11 = vector.extract_strided_slice %10 {offsets = [0, 0], sizes = [16, 32], strides = [1, 1]} : vector<48x128xf32> to vector<16x32xf32>
    %12 = vector.extract_strided_slice %1 {offsets = [0, 0], sizes = [1, 32], strides = [1, 1]} : vector<1x128xf32> to vector<1x32xf32>
    %13 = vector.broadcast %12 : vector<1x32xf32> to vector<16x32xf32>
    %14 = arith.addf %11, %13 : vector<16x32xf32>
    %15 = vector.shape_cast %14 : vector<16x32xf32> to vector<2x8x32xf32>
    %16 = vector.extract_strided_slice %10 {offsets = [16, 32], sizes = [16, 32], strides = [1, 1]} : vector<48x128xf32> to vector<16x32xf32>
    %17 = vector.extract_strided_slice %1 {offsets = [0, 32], sizes = [1, 32], strides = [1, 1]} : vector<1x128xf32> to vector<1x32xf32>
    %18 = vector.broadcast %17 : vector<1x32xf32> to vector<16x32xf32>
    %19 = arith.addf %16, %18 : vector<16x32xf32>
    %20 = vector.shape_cast %19 : vector<16x32xf32> to vector<2x8x32xf32>
    %21 = vector.extract_strided_slice %10 {offsets = [32, 64], sizes = [16, 32], strides = [1, 1]} : vector<48x128xf32> to vector<16x32xf32>
    %22 = vector.extract_strided_slice %1 {offsets = [0, 64], sizes = [1, 32], strides = [1, 1]} : vector<1x128xf32> to vector<1x32xf32>
    %23 = vector.broadcast %22 : vector<1x32xf32> to vector<16x32xf32>
    %24 = arith.addf %21, %23 : vector<16x32xf32>
    %25 = vector.shape_cast %24 : vector<16x32xf32> to vector<2x8x32xf32>
    %26 = vector.extract_strided_slice %15 {offsets = [0, 0, 0], sizes = [2, 8, 8], strides = [1, 1, 1]} : vector<2x8x32xf32> to vector<2x8x8xf32>
    %27 = vector.extract_strided_slice %15 {offsets = [0, 0, 8], sizes = [2, 8, 8], strides = [1, 1, 1]} : vector<2x8x32xf32> to vector<2x8x8xf32>
    %28 = vector.extract_strided_slice %15 {offsets = [0, 0, 16], sizes = [2, 8, 8], strides = [1, 1, 1]} : vector<2x8x32xf32> to vector<2x8x8xf32>
    %29 = vector.extract_strided_slice %15 {offsets = [0, 0, 24], sizes = [2, 8, 8], strides = [1, 1, 1]} : vector<2x8x32xf32> to vector<2x8x8xf32>
    %30 = tpu.concatenate %26, %27, %28, %29 in 0 : vector<2x8x8xf32>, vector<2x8x8xf32>, vector<2x8x8xf32>, vector<2x8x8xf32> -> vector<8x8x8xf32>
    %31 = arith.truncf %30 : vector<8x8x8xf32> to vector<8x8x8xbf16>
    %32 = vector.extract_strided_slice %20 {offsets = [0, 0, 0], sizes = [2, 8, 8], strides = [1, 1, 1]} : vector<2x8x32xf32> to vector<2x8x8xf32>
    %33 = vector.extract_strided_slice %20 {offsets = [0, 0, 8], sizes = [2, 8, 8], strides = [1, 1, 1]} : vector<2x8x32xf32> to vector<2x8x8xf32>
    %34 = vector.extract_strided_slice %20 {offsets = [0, 0, 16], sizes = [2, 8, 8], strides = [1, 1, 1]} : vector<2x8x32xf32> to vector<2x8x8xf32>
    %35 = vector.extract_strided_slice %20 {offsets = [0, 0, 24], sizes = [2, 8, 8], strides = [1, 1, 1]} : vector<2x8x32xf32> to vector<2x8x8xf32>
    %36 = tpu.concatenate %32, %33, %34, %35 in 0 : vector<2x8x8xf32>, vector<2x8x8xf32>, vector<2x8x8xf32>, vector<2x8x8xf32> -> vector<8x8x8xf32>
    %37 = arith.truncf %36 : vector<8x8x8xf32> to vector<8x8x8xbf16>
    %38 = tpu.iota {dimensions = array<i32: 2>} : vector<1x1x32xi32>
    %c0_i32 = arith.constant 0 : i32
    %39 = vector.broadcast %c0_i32 : i32 to vector<1x1x32xi32>
    %40 = arith.cmpi sge, %38, %39 : vector<1x1x32xi32>
    %c8_i32 = arith.constant 8 : i32
    %41 = vector.broadcast %c8_i32 : i32 to vector<1x1x32xi32>
    %42 = arith.cmpi slt, %38, %41 : vector<1x1x32xi32>
    %43 = arith.andi %40, %42 : vector<1x1x32xi1>
    %cst_12 = arith.constant 0.000000e+00 : f32
    %44 = vector.shape_cast %43 : vector<1x1x32xi1> to vector<1x1x32xi1>
    %45 = vector.broadcast %44 : vector<1x1x32xi1> to vector<2x8x32xi1>
    %46 = vector.broadcast %cst_12 : f32 to vector<2x8x32xf32>
    %47 = arith.select %45, %25, %46 : vector<2x8x32xi1>, vector<2x8x32xf32>
    %c8_i32_13 = arith.constant 8 : i32
    %48 = vector.broadcast %c8_i32_13 : i32 to vector<1x1x32xi32>
    %49 = arith.cmpi sge, %38, %48 : vector<1x1x32xi32>
    %c16_i32 = arith.constant 16 : i32
    %50 = vector.broadcast %c16_i32 : i32 to vector<1x1x32xi32>
    %51 = arith.cmpi slt, %38, %50 : vector<1x1x32xi32>
    %52 = arith.andi %49, %51 : vector<1x1x32xi1>
    %cst_14 = arith.constant 0.000000e+00 : f32
    %53 = vector.shape_cast %52 : vector<1x1x32xi1> to vector<1x1x32xi1>
    %54 = vector.broadcast %53 : vector<1x1x32xi1> to vector<2x8x32xi1>
    %55 = vector.broadcast %cst_14 : f32 to vector<2x8x32xf32>
    %56 = arith.select %54, %25, %55 : vector<2x8x32xi1>, vector<2x8x32xf32>
    %c16_i32_15 = arith.constant 16 : i32
    %57 = vector.broadcast %c16_i32_15 : i32 to vector<1x1x32xi32>
    %58 = arith.cmpi sge, %38, %57 : vector<1x1x32xi32>
    %c24_i32 = arith.constant 24 : i32
    %59 = vector.broadcast %c24_i32 : i32 to vector<1x1x32xi32>
    %60 = arith.cmpi slt, %38, %59 : vector<1x1x32xi32>
    %61 = arith.andi %58, %60 : vector<1x1x32xi1>
    %cst_16 = arith.constant 0.000000e+00 : f32
    %62 = vector.shape_cast %61 : vector<1x1x32xi1> to vector<1x1x32xi1>
    %63 = vector.broadcast %62 : vector<1x1x32xi1> to vector<2x8x32xi1>
    %64 = vector.broadcast %cst_16 : f32 to vector<2x8x32xf32>
    %65 = arith.select %63, %25, %64 : vector<2x8x32xi1>, vector<2x8x32xf32>
    %c24_i32_17 = arith.constant 24 : i32
    %66 = vector.broadcast %c24_i32_17 : i32 to vector<1x1x32xi32>
    %67 = arith.cmpi sge, %38, %66 : vector<1x1x32xi32>
    %c32_i32 = arith.constant 32 : i32
    %68 = vector.broadcast %c32_i32 : i32 to vector<1x1x32xi32>
    %69 = arith.cmpi slt, %38, %68 : vector<1x1x32xi32>
    %70 = arith.andi %67, %69 : vector<1x1x32xi1>
    %cst_18 = arith.constant 0.000000e+00 : f32
    %71 = vector.shape_cast %70 : vector<1x1x32xi1> to vector<1x1x32xi1>
    %72 = vector.broadcast %71 : vector<1x1x32xi1> to vector<2x8x32xi1>
    %73 = vector.broadcast %cst_18 : f32 to vector<2x8x32xf32>
    %74 = arith.select %72, %25, %73 : vector<2x8x32xi1>, vector<2x8x32xf32>
    %75 = tpu.concatenate %47, %56, %65, %74 in 0 : vector<2x8x32xf32>, vector<2x8x32xf32>, vector<2x8x32xf32>, vector<2x8x32xf32> -> vector<8x8x32xf32>
    %76 = arith.truncf %75 : vector<8x8x32xf32> to vector<8x8x32xbf16>
    "tpu.trace_start"() <{level = 10 : i32, message = "bqd,bkd->bqk"}> : () -> ()
    %cst_19 = arith.constant dense<0.000000e+00> : vector<8x8x8xf32>
    %77 = tpu.matmul %31, %37, %cst_19 {dimension_numbers = #tpu.dot_dimension_numbers<[2], [2], [1], [1], [0, 0, 0, 1, 1, 1], [0], [0]>} : vector<8x8x8xbf16>, vector<8x8x8xbf16>, vector<8x8x8xf32> -> vector<8x8x8xf32>
    "tpu.trace_stop"() : () -> ()
    %cst_20 = arith.constant dense<0xFF800000> : vector<8x8xf32>
    %78 = vector.multi_reduction <maximumf>, %77, %cst_20 [2] : vector<8x8x8xf32> to vector<8x8xf32>
    %79 = vector.shape_cast %78 : vector<8x8xf32> to vector<8x8x1xf32>
    %80 = vector.broadcast %79 : vector<8x8x1xf32> to vector<8x8x8xf32>
    %81 = arith.subf %77, %80 : vector<8x8x8xf32>
    %82 = math.exp %81 : vector<8x8x8xf32>
    %cst_21 = arith.constant dense<0.000000e+00> : vector<8x8xf32>
    %83 = vector.multi_reduction <add>, %82, %cst_21 [2] : vector<8x8x8xf32> to vector<8x8xf32>
    %84 = vector.shape_cast %83 : vector<8x8xf32> to vector<8x8x1xf32>
    %85 = tpu.reciprocal %84 {approx = true} : vector<8x8x1xf32> -> vector<8x8x1xf32>
    %86 = vector.broadcast %85 : vector<8x8x1xf32> to vector<8x8x8xf32>
    %87 = arith.mulf %82, %86 : vector<8x8x8xf32>
    %88 = arith.truncf %87 : vector<8x8x8xf32> to vector<8x8x8xbf16>
    "tpu.trace_start"() <{level = 10 : i32, message = "bqk,bkd->bqd"}> : () -> ()
    %cst_22 = arith.constant dense<0.000000e+00> : vector<8x8x32xf32>
    %89 = tpu.matmul %88, %76, %cst_22 {dimension_numbers = #tpu.dot_dimension_numbers<[2], [1], [1], [2], [0, 0, 0, 1, 1, 2], [0], [0]>} : vector<8x8x8xbf16>, vector<8x8x32xbf16>, vector<8x8x32xf32> -> vector<8x8x32xf32>
    "tpu.trace_stop"() : () -> ()
    %90 = vector.shape_cast %89 : vector<8x8x32xf32> to vector<4x16x32xf32>
    %cst_23 = arith.constant dense<0.000000e+00> : vector<16x32xf32>
    %91 = vector.multi_reduction <add>, %90, %cst_23 [0] : vector<4x16x32xf32> to vector<16x32xf32>
    %92 = arith.truncf %91 : vector<16x32xf32> to vector<16x32xbf16>
    %93 = vector.extract_strided_slice %0 {offsets = [0, 96], sizes = [32, 32], strides = [1, 1]} : vector<32x128xbf16> to vector<32x32xbf16>
    %cst_24 = arith.constant dense<0.000000e+00> : vector<16x32xf32>
    %94 = tpu.matmul %92, %93, %cst_24 {dimension_numbers = #tpu.dot_dimension_numbers<[1], [0], [0], [1], [0, 0, 1, 1], [], []>} : vector<16x32xbf16>, vector<32x32xbf16>, vector<16x32xf32> -> vector<16x32xf32>
    %95 = vector.extract_strided_slice %1 {offsets = [0, 96], sizes = [1, 32], strides = [1, 1]} : vector<1x128xf32> to vector<1x32xf32>
    %96 = vector.broadcast %95 : vector<1x32xf32> to vector<16x32xf32>
    %97 = arith.addf %94, %96 : vector<16x32xf32>
    %98 = vector.shape_cast %97 : vector<16x32xf32> to vector<2x8x32xf32>
    %c0_25 = arith.constant 0 : index
    %c0_26 = arith.constant 0 : index
    %c0_27 = arith.constant 0 : index
    %99 = vector.load %arg5[%c0_25, %c0_26, %c0_27] : memref<2x8x32xf32, #tpu.memory_space<vmem>>, vector<2x8x32xf32>
    tpu.vector_store %arg5[%c0_25, %c0_26, %c0_27], %98 {strides = array<i32>} : memref<2x8x32xf32, #tpu.memory_space<vmem>>, vector<2x8x32xf32>,
    return
  }
}

</mosaic_0001>

<llo_original>
// kernel: tpu_custom_call.1
$region0: #{tpu_custom_call.1}
  #allocation0 [shape = 'u32[]', space=smem, size = 0x4, offset = 0x4, fixed_abs, tag = 'smem constant byte address 0x4 - core index']
  #allocation1 [shape = 'u32[144,128]{1,0:T(1,128)}', space=vmem, size = 0x12000, scoped, tag = 'internal scratch']
  %s0 = inlined_call_operand.hbm [shape: f32[2,8,32], index: 0, kind: input, shape index: {}]
  %s1 = inlined_call_operand.hbm [shape: f32[2,8,32], index: 1, kind: input, shape index: {}]
  %s2 = inlined_call_operand.hbm [shape: f32[2,8,32], index: 2, kind: input, shape index: {}]
  %s3 = inlined_call_operand.hbm [shape: bf16[32,128], index: 3, kind: input, shape index: {}]
  %s4 = inlined_call_operand.vmem [shape: f32[1,128], index: 4, kind: input, shape index: {}]
  %s5 = inlined_call_operand.hbm [shape: f32[2,8,32], index: 5, kind: output, shape index: {}]
  %s6 = sld [smem:[#allocation0]]
  $region46: #{tpu_custom_call.1} parent=0
    _
  %s8 = ssub.s32 1, %s6
  %s9 = scalar_select 0, %s8, %s6
  $region1: #{tpu_custom_call.1} parent=0
    #allocation2 [shape = 'u8[8192]{0}', space=vmem, size = 0x2000, scoped, tag = 'input window, operand 0, single buffered']
    #allocation3 [shape = 's32[1]{0}', space=sflag, size = 0x4, scoped, tag = 'scoped memory for tpu_custom_call.1']
    #allocation4 [shape = 's32[1]{0}', space=sflag, size = 0x4, scoped, tag = 'scoped memory for tpu_custom_call.1']
    #allocation5 [shape = 'u8[8192]{0}', space=vmem, size = 0x2000, scoped, tag = 'input window, operand 1, single buffered']
    #allocation6 [shape = 's32[1]{0}', space=sflag, size = 0x4, scoped, tag = 'scoped memory for tpu_custom_call.1']
    #allocation7 [shape = 'u8[8192]{0}', space=vmem, size = 0x2000, scoped, tag = 'input window, operand 2, single buffered']
    #allocation8 [shape = 'u8[8192]{0}', space=vmem, size = 0x2000, scoped, tag = 'input window, operand 3, single buffered']
    #allocation9 [shape = 's32[1]{0}', space=sflag, size = 0x4, scoped, tag = 'scoped memory for tpu_custom_call.1']
    #allocation10 [shape = 'u8[8192]{0}', space=vmem, size = 0x2000, scoped, tag = 'output window, operand 0, single buffered']
    %10 = vsyncpa [#allocation3], 0
    %11 = vsyncpa [#allocation6], 0
    %12 = vsyncpa [#allocation9], 0
    %13 = vsyncpa [#allocation4], 0
    // Predicated region
    $region2: #{tpu_custom_call.1} parent=1 // pred_check
      _
    $region3: #{tpu_custom_call.1} parent=1 // pred_check_branch
      %15 = sbr.rel (0) target = $region5
    $region4: #{tpu_custom_call.1} parent=1 // pred_region
      %s17 = ssub.s32 256, 256
      %18 = vsyncadd [#allocation3], %s17
      %s19 = sshll.u32 [#allocation2], 4
      %s20 = int_to_ptr.vmem [resolvable:$true] %s19
      %25 = dma.hbm_to_vmem [thread:$0]  %s0, 256, %s20, [#allocation3], 128, 128, 8
    $region5: #{tpu_custom_call.1} parent=1 // pred_fallthru
      _
    // Predicated region
    $region6: #{tpu_custom_call.1} parent=1 // pred_check
      _
    $region7: #{tpu_custom_call.1} parent=1 // pred_check_branch
      %27 = sbr.rel (0) target = $region9
    $region8: #{tpu_custom_call.1} parent=1 // pred_region
      %s29 = ssub.s32 256, 256
      %30 = vsyncadd [#allocation6], %s29
      %s31 = sshll.u32 [#allocation5], 4
      %s32 = int_to_ptr.vmem [resolvable:$true] %s31
      %37 = dma.hbm_to_vmem [thread:$0]  %s1, 256, %s32, [#allocation6], 128, 128, 8
    $region9: #{tpu_custom_call.1} parent=1 // pred_fallthru
      _
    // Predicated region
    $region10: #{tpu_custom_call.1} parent=1 // pred_check
      _
    $region11: #{tpu_custom_call.1} parent=1 // pred_check_branch
      %39 = sbr.rel (0) target = $region13
    $region12: #{tpu_custom_call.1} parent=1 // pred_region
      %s41 = ssub.s32 256, 256
      %42 = vsyncadd [#allocation6], %s41
      %s43 = sshll.u32 [#allocation7], 4
      %s44 = int_to_ptr.vmem [resolvable:$true] %s43
      %49 = dma.hbm_to_vmem [thread:$0]  %s2, 256, %s44, [#allocation6], 128, 128, 8
    $region13: #{tpu_custom_call.1} parent=1 // pred_fallthru
      _
    // Predicated region
    $region14: #{tpu_custom_call.1} parent=1 // pred_check
      _
    $region15: #{tpu_custom_call.1} parent=1 // pred_check_branch
      %51 = sbr.rel (0) target = $region17
    $region16: #{tpu_custom_call.1} parent=1 // pred_region
      %s53 = ssub.s32 256, 256
      %54 = vsyncadd [#allocation9], %s53
      %s55 = sshll.u32 [#allocation8], 4
      %s56 = int_to_ptr.vmem [resolvable:$true] %s55
      %61 = dma.hbm_to_vmem [thread:$0]  %s3, 256, %s56, [#allocation9], 64, 64, 4
    $region17: #{tpu_custom_call.1} parent=1 // pred_fallthru
      _
    // Predicated region
    $region18: #{tpu_custom_call.1} parent=1 // pred_check
      _
    $region19: #{tpu_custom_call.1} parent=1 // pred_check_branch
      %63 = sbr.rel (0) target = $region21
    $region20: #{tpu_custom_call.1} parent=1 // pred_region
      _
    $region21: #{tpu_custom_call.1} parent=1 // pred_fallthru
      _
    // Predicated region
    $region22: #{tpu_custom_call.1} parent=1 // pred_check
      _
    $region23: #{tpu_custom_call.1} parent=1 // pred_check_branch
      %65 = sbr.rel (0) target = $region25
    $region24: #{tpu_custom_call.1} parent=1 // pred_region
      %66 = dma.done [#allocation3], 256
    $region25: #{tpu_custom_call.1} parent=1 // pred_fallthru
      _
    // Predicated region
    $region26: #{tpu_custom_call.1} parent=1 // pred_check
      _
    $region27: #{tpu_custom_call.1} parent=1 // pred_check_branch
      %68 = sbr.rel (0) target = $region29
    $region28: #{tpu_custom_call.1} parent=1 // pred_region
      %69 = dma.done [#allocation6], 256
    $region29: #{tpu_custom_call.1} parent=1 // pred_fallthru
      _
    // Predicated region
    $region30: #{tpu_custom_call.1} parent=1 // pred_check
      _
    $region31: #{tpu_custom_call.1} parent=1 // pred_check_branch
      %71 = sbr.rel (0) target = $region33
    $region32: #{tpu_custom_call.1} parent=1 // pred_region
      %72 = dma.done [#allocation6], 256
    $region33: #{tpu_custom_call.1} parent=1 // pred_fallthru
      _
    // Predicated region
    $region34: #{tpu_custom_call.1} parent=1 // pred_check
      _
    $region35: #{tpu_custom_call.1} parent=1 // pred_check_branch
      %74 = sbr.rel (0) target = $region37
    $region36: #{tpu_custom_call.1} parent=1 // pred_region
      %75 = dma.done [#allocation9], 256
    $region37: #{tpu_custom_call.1} parent=1 // pred_fallthru
      _
    %v77 = vld [vmem:[#allocation8] sm:$0xf]
    %v78 = vld [vmem:[#allocation8 + $0x4] sm:$0xf]
    %v79 = vld [vmem:[#allocation8 + $0x8] sm:$0xf]
    %v80 = vld [vmem:[#allocation8 + $0xc] sm:$0xf]
    %v81 = vld [vmem:[%s4] sm:$0x1]
    %v82 = vld [vmem:[#allocation2] sm:$0xff]
    %v83 = vld [vmem:[#allocation2 + $0x8] sm:$0xff]
    %v84 = vld [vmem:[#allocation5] sm:$0xff]
    %v85 = vld [vmem:[#allocation5 + $0x8] sm:$0xff]
    %v86 = vld [vmem:[#allocation7] sm:$0xff]
    %v87 = vld [vmem:[#allocation7 + $0x8] sm:$0xff]
    %v88 = vpack.c.bf16 %v83, %v82
    %v89 = vpack.c.bf16 %v85, %v84
    %v90 = vpack.c.bf16 %v87, %v86
    %v95 = vunpack.c.l.b16 %v77
    %v96 = vunpack.c.l.b16 %v78
    %v97 = vunpack.c.l.b16 %v79
    %v98 = vunpack.c.l.b16 %v80
    %v99 = vpack.c.b16 %v96, %v95
    %v100 = vpack.c.b16 %v98, %v97
    %vm103 = vcmask 261120
    %v105 = vsel %vm103, %v88, 0
    %v108 = vsel %vm103, %v89, 0
    %v111 = vsel %vm103, %v90, 0
    %113 = vmatprep.subr.bf16.mxu0 0
    %114 = vmatpush1.bf16.msra.mxu0 %v99
    %115 = vmatprep.subr.bf16.mxu0 0
    %116 = vmatpush1.bf16.msra.mxu0 %v100
    %117 = vmatprep.subr.bf16.mxu0 0
    %118 = vmatpush1.bf16.msra.mxu0 0
    %119 = vmatprep.subr.bf16.mxu0 0
    %120 = vmatpush1.bf16.msra.mxu0 0
    %121 = vmatprep.subr.bf16.mxu0 0
    %122 = vmatpush1.bf16.msra.mxu0 0
    %123 = vmatprep.subr.bf16.mxu0 0
    %124 = vmatpush1.bf16.msra.mxu0 0
    %125 = vmatprep.subr.bf16.mxu0 0
    %126 = vmatpush1.bf16.msra.mxu0 0
    %127 = vmatprep.subr.bf16.mxu0 0
    %128 = vmatpush1.bf16.msra.mxu0 0
    %129 = vmatprep.subr.bf16.mxu0 0
    %130 = vmatpush1.bf16.msra.mxu0 0
    %131 = vmatprep.subr.bf16.mxu0 0
    %132 = vmatpush1.bf16.msra.mxu0 0
    %133 = vmatprep.subr.bf16.mxu0 0
    %134 = vmatpush1.bf16.msra.mxu0 0
    %135 = vmatprep.subr.bf16.mxu0 0
    %136 = vmatpush1.bf16.msra.mxu0 0
    %137 = vmatprep.subr.bf16.mxu0 0
    %138 = vmatpush1.bf16.msra.mxu0 0
    %139 = vmatprep.subr.bf16.mxu0 0
    %140 = vmatpush1.bf16.msra.mxu0 0
    %141 = vmatprep.subr.bf16.mxu0 0
    %142 = vmatpush1.bf16.msra.mxu0 0
    %143 = vmatprep.subr.bf16.mxu0 0
    %144 = vmatpush1.bf16.msra.mxu0 0
    %145 = vmatprep.mubr.bf16.mxu0 0
    %146 = vmatmul.mubr.bf16.gmra.mrb[0].mxu0 %v105
    %v147 = vpop.f32.mrb[0].mxu0
    %v148 = vadd.f32 0.0, %v147
    %v149 = vpop.f32.mrb[0].mxu0
    %v150 = vpop.f32.mrb[0].mxu0
    %v151 = vadd.f32 0.0, %v150
    %v152 = vpop.f32.mrb[0].mxu0
    %153 = vmatprep.mubr.bf16.mxu0 0
    %154 = vmatmul.mubr.bf16.gmra.mrb[0].mxu0 %v108
    %v155 = vpop.f32.mrb[0].mxu0
    %v156 = vadd.f32 0.0, %v155
    %v157 = vpop.f32.mrb[0].mxu0
    %v158 = vpop.f32.mrb[0].mxu0
    %v159 = vadd.f32 0.0, %v158
    %v160 = vpop.f32.mrb[0].mxu0
    %161 = vmatprep.mubr.bf16.mxu0 0
    %162 = vmatmul.mubr.bf16.gmra.mrb[0].mxu0 %v111
    %v163 = vpop.f32.mrb[0].mxu0
    %v164 = vadd.f32 0.0, %v163
    %v165 = vpop.f32.mrb[0].mxu0
    %v166 = vpop.f32.mrb[0].mxu0
    %v167 = vadd.f32 0.0, %v166
    %v168 = vpop.f32.mrb[0].mxu0
    %169 = vdwg.mxu0
    %v171 = vlaneseq
    %v172 = vshrl.u32 %v171, 7
    %v173 = vsub.s32 0, %v172
    %v174 = vrot.slane %v81, %v173
    %v176 = vadd.f32 %v148, %v174
    %v177 = vadd.f32 %v151, %v174
    %v178 = vadd.f32 %v156, %v174
    %v179 = vadd.f32 %v159, %v174
    %v180 = vadd.f32 %v164, %v174
    %v181 = vadd.f32 %v167, %v174
    %184 = vrot.lane.b32.xlu0 %v176, 120
    %v185 = vpop.permute.xlu0 %184
    %186 = vrot.lane.b32.xlu0 %v177, 120
    %v187 = vpop.permute.xlu0 %186
    %190 = vrot.lane.b32.xlu0 %v176, 112
    %v191 = vpop.permute.xlu0 %190
    %192 = vrot.lane.b32.xlu0 %v177, 112
    %v193 = vpop.permute.xlu0 %192
    %196 = vrot.lane.b32.xlu0 %v176, 104
    %v197 = vpop.permute.xlu0 %196
    %198 = vrot.lane.b32.xlu0 %v177, 104
    %v199 = vpop.permute.xlu0 %198
    %v202 = vpack.c.bf16 %v176, %v176
    %v203 = vpack.c.bf16 %v177, %v177
    %v204 = vpack.c.bf16 %v185, %v185
    %v205 = vpack.c.bf16 %v187, %v187
    %v206 = vpack.c.bf16 %v191, %v191
    %v207 = vpack.c.bf16 %v193, %v193
    %v208 = vpack.c.bf16 %v197, %v197
    %v209 = vpack.c.bf16 %v199, %v199
    %212 = vrot.lane.b32.xlu0 %v178, 120
    %v213 = vpop.permute.xlu0 %212
    %214 = vrot.lane.b32.xlu0 %v179, 120
    %v215 = vpop.permute.xlu0 %214
    %218 = vrot.lane.b32.xlu0 %v178, 112
    %v219 = vpop.permute.xlu0 %218
    %220 = vrot.lane.b32.xlu0 %v179, 112
    %v221 = vpop.permute.xlu0 %220
    %224 = vrot.lane.b32.xlu0 %v178, 104
    %v225 = vpop.permute.xlu0 %224
    %226 = vrot.lane.b32.xlu0 %v179, 104
    %v227 = vpop.permute.xlu0 %226
    %v230 = vpack.c.bf16 %v178, %v178
    %v231 = vpack.c.bf16 %v179, %v179
    %v232 = vpack.c.bf16 %v213, %v213
    %v233 = vpack.c.bf16 %v215, %v215
    %v234 = vpack.c.bf16 %v219, %v219
    %v235 = vpack.c.bf16 %v221, %v221
    %v236 = vpack.c.bf16 %v225, %v225
    %v237 = vpack.c.bf16 %v227, %v227
    %v238 = vlaneseq
    %v239 = vand.u32 %v238, 127
    %vm240 = vcmp.ge.s32.totalorder %v239, 0
    %vm241 = vcmp.lt.s32.totalorder %v239, 8
    %vm242 = vmand %vm240, %vm241
    %v243 = vsel %vm242, 1, 0
    %vm244 = vcmp.eq.s32.totalorder %v243, 1
    %247 = vrot.lane.b32.xlu0 %v180, 64
    %v248 = vpop.permute.xlu0 %247
    %249 = vrot.lane.b32.xlu0 %v181, 64
    %v250 = vpop.permute.xlu0 %249
    %v253 = vsel %vm244, %v248, 0.0
    %v254 = vsel %vm244, %v250, 0.0
    %vm255 = vcmp.ge.s32.totalorder %v239, 8
    %vm256 = vcmp.lt.s32.totalorder %v239, 16
    %vm257 = vmand %vm255, %vm256
    %v258 = vsel %vm257, 1, 0
    %vm259 = vcmp.eq.s32.totalorder %v258, 1
    %v260 = vsel %vm259, %v248, 0.0
    %v261 = vsel %vm259, %v250, 0.0
    %vm262 = vcmp.ge.s32.totalorder %v239, 16
    %vm263 = vcmp.lt.s32.totalorder %v239, 24
    %vm264 = vmand %vm262, %vm263
    %v265 = vsel %vm264, 1, 0
    %vm266 = vcmp.eq.s32.totalorder %v265, 1
    %v267 = vsel %vm266, %v248, 0.0
    %v268 = vsel %vm266, %v250, 0.0
    %vm269 = vcmp.ge.s32.totalorder %v239, 24
    %vm270 = vcmp.lt.s32.totalorder %v239, 32
    %vm271 = vmand %vm269, %vm270
    %v272 = vsel %vm271, 1, 0
    %vm273 = vcmp.eq.s32.totalorder %v272, 1
    %v274 = vsel %vm273, %v248, 0.0
    %v275 = vsel %vm273, %v250, 0.0
    %v276 = vpack.c.bf16 %v253, %v253
    %v277 = vpack.c.bf16 %v254, %v254
    %v278 = vpack.c.bf16 %v260, %v260
    %v279 = vpack.c.bf16 %v261, %v261
    %v280 = vpack.c.bf16 %v267, %v267
    %v281 = vpack.c.bf16 %v268, %v268
    %v282 = vpack.c.bf16 %v274, %v274
    %v283 = vpack.c.bf16 %v275, %v275
    %285 = vrot.lane.b32.xlu0 %v230, 96
    %v286 = vpop.permute.xlu0 %285
    %vm287 = vcmask 64512
    %v289 = vsel %vm287, %v202, 0
    %v292 = vsel %vm287, %v286, 0
    %294 = vmatprep.subr.bf16.mxu0 0
    %295 = vmatpush1.bf16.xpose.msra.mxu0 %v292
    %296 = vmatprep.subr.bf16.mxu0 0
    %297 = vmatpush1.bf16.xpose.msra.mxu0 0
    %298 = vmatprep.subr.bf16.mxu0 0
    %299 = vmatpush1.bf16.xpose.msra.mxu0 0
    %300 = vmatprep.subr.bf16.mxu0 0
    %301 = vmatpush1.bf16.xpose.msra.mxu0 0
    %302 = vmatprep.subr.bf16.mxu0 0
    %303 = vmatpush1.bf16.xpose.msra.mxu0 0
    %304 = vmatprep.subr.bf16.mxu0 0
    %305 = vmatpush1.bf16.xpose.msra.mxu0 0
    %306 = vmatprep.subr.bf16.mxu0 0
    %307 = vmatpush1.bf16.xpose.msra.mxu0 0
    %308 = vmatprep.subr.bf16.mxu0 0
    %309 = vmatpush1.bf16.xpose.msra.mxu0 0
    %310 = vmatprep.subr.bf16.mxu0 0
    %311 = vmatpush1.bf16.xpose.msra.mxu0 0
    %312 = vmatprep.subr.bf16.mxu0 0
    %313 = vmatpush1.bf16.xpose.msra.mxu0 0
    %314 = vmatprep.subr.bf16.mxu0 0
    %315 = vmatpush1.bf16.xpose.msra.mxu0 0
    %316 = vmatprep.subr.bf16.mxu0 0
    %317 = vmatpush1.bf16.xpose.msra.mxu0 0
    %318 = vmatprep.subr.bf16.mxu0 0
    %319 = vmatpush1.bf16.xpose.msra.mxu0 0
    %320 = vmatprep.subr.bf16.mxu0 0
    %321 = vmatpush1.bf16.xpose.msra.mxu0 0
    %322 = vmatprep.subr.bf16.mxu0 0
    %323 = vmatpush1.bf16.xpose.msra.mxu0 0
    %324 = vmatprep.subr.bf16.mxu0 0
    %325 = vmatpush1.bf16.xpose.msra.mxu0 0
    %326 = vmatprep.mubr.bf16.mxu0 0
    %327 = vmatmul.mubr.bf16.gmra.mrb[0].mxu0 %v289
    %v328 = vpop.f32.mrb[0].mxu0
    %v329 = vadd.f32 0.0, %v328
    %v330 = vpop.f32.mrb[0].mxu0
    %v331 = vpop.f32.mrb[0].mxu0
    %v332 = vpop.f32.mrb[0].mxu0
    %333 = vdwg.mxu0
    %335 = vrot.lane.b32.xlu0 %v231, 96
    %v336 = vpop.permute.xlu0 %335
    %v338 = vsel %vm287, %v203, 0
    %v341 = vsel %vm287, %v336, 0
    %343 = vmatprep.subr.bf16.mxu0 0
    %344 = vmatpush1.bf16.xpose.msra.mxu0 %v341
    %345 = vmatprep.subr.bf16.mxu0 0
    %346 = vmatpush1.bf16.xpose.msra.mxu0 0
    %347 = vmatprep.subr.bf16.mxu0 0
    %348 = vmatpush1.bf16.xpose.msra.mxu0 0
    %349 = vmatprep.subr.bf16.mxu0 0
    %350 = vmatpush1.bf16.xpose.msra.mxu0 0
    %351 = vmatprep.subr.bf16.mxu0 0
    %352 = vmatpush1.bf16.xpose.msra.mxu0 0
    %353 = vmatprep.subr.bf16.mxu0 0
    %354 = vmatpush1.bf16.xpose.msra.mxu0 0
    %355 = vmatprep.subr.bf16.mxu0 0
    %356 = vmatpush1.bf16.xpose.msra.mxu0 0
    %357 = vmatprep.subr.bf16.mxu0 0
    %358 = vmatpush1.bf16.xpose.msra.mxu0 0
    %359 = vmatprep.subr.bf16.mxu0 0
    %360 = vmatpush1.bf16.xpose.msra.mxu0 0
    %361 = vmatprep.subr.bf16.mxu0 0
    %362 = vmatpush1.bf16.xpose.msra.mxu0 0
    %363 = vmatprep.subr.bf16.mxu0 0
    %364 = vmatpush1.bf16.xpose.msra.mxu0 0
    %365 = vmatprep.subr.bf16.mxu0 0
    %366 = vmatpush1.bf16.xpose.msra.mxu0 0
    %367 = vmatprep.subr.bf16.mxu0 0
    %368 = vmatpush1.bf16.xpose.msra.mxu0 0
    %369 = vmatprep.subr.bf16.mxu0 0
    %370 = vmatpush1.bf16.xpose.msra.mxu0 0
    %371 = vmatprep.subr.bf16.mxu0 0
    %372 = vmatpush1.bf16.xpose.msra.mxu0 0
    %373 = vmatprep.subr.bf16.mxu0 0
    %374 = vmatpush1.bf16.xpose.msra.mxu0 0
    %375 = vmatprep.mubr.bf16.mxu0 0
    %376 = vmatmul.mubr.bf16.gmra.mrb[0].mxu0 %v338
    %v377 = vpop.f32.mrb[0].mxu0
    %v378 = vadd.f32 0.0, %v377
    %v379 = vpop.f32.mrb[0].mxu0
    %v380 = vpop.f32.mrb[0].mxu0
    %v381 = vpop.f32.mrb[0].mxu0
    %382 = vdwg.mxu0
    %384 = vrot.lane.b32.xlu0 %v232, 96
    %v385 = vpop.permute.xlu0 %384
    %v387 = vsel %vm287, %v204, 0
    %v390 = vsel %vm287, %v385, 0
    %392 = vmatprep.subr.bf16.mxu0 0
    %393 = vmatpush1.bf16.xpose.msra.mxu0 %v390
    %394 = vmatprep.subr.bf16.mxu0 0
    %395 = vmatpush1.bf16.xpose.msra.mxu0 0
    %396 = vmatprep.subr.bf16.mxu0 0
    %397 = vmatpush1.bf16.xpose.msra.mxu0 0
    %398 = vmatprep.subr.bf16.mxu0 0
    %399 = vmatpush1.bf16.xpose.msra.mxu0 0
    %400 = vmatprep.subr.bf16.mxu0 0
    %401 = vmatpush1.bf16.xpose.msra.mxu0 0
    %402 = vmatprep.subr.bf16.mxu0 0
    %403 = vmatpush1.bf16.xpose.msra.mxu0 0
    %404 = vmatprep.subr.bf16.mxu0 0
    %405 = vmatpush1.bf16.xpose.msra.mxu0 0
    %406 = vmatprep.subr.bf16.mxu0 0
    %407 = vmatpush1.bf16.xpose.msra.mxu0 0
    %408 = vmatprep.subr.bf16.mxu0 0
    %409 = vmatpush1.bf16.xpose.msra.mxu0 0
    %410 = vmatprep.subr.bf16.mxu0 0
    %411 = vmatpush1.bf16.xpose.msra.mxu0 0
    %412 = vmatprep.subr.bf16.mxu0 0
    %413 = vmatpush1.bf16.xpose.msra.mxu0 0
    %414 = vmatprep.subr.bf16.mxu0 0
    %415 = vmatpush1.bf16.xpose.msra.mxu0 0
    %416 = vmatprep.subr.bf16.mxu0 0
    %417 = vmatpush1.bf16.xpose.msra.mxu0 0
    %418 = vmatprep.subr.bf16.mxu0 0
    %419 = vmatpush1.bf16.xpose.msra.mxu0 0
    %420 = vmatprep.subr.bf16.mxu0 0
    %421 = vmatpush1.bf16.xpose.msra.mxu0 0
    %422 = vmatprep.subr.bf16.mxu0 0
    %423 = vmatpush1.bf16.xpose.msra.mxu0 0
    %424 = vmatprep.mubr.bf16.mxu0 0
    %425 = vmatmul.mubr.bf16.gmra.mrb[0].mxu0 %v387
    %v426 = vpop.f32.mrb[0].mxu0
    %v427 = vadd.f32 0.0, %v426
    %v428 = vpop.f32.mrb[0].mxu0
    %v429 = vpop.f32.mrb[0].mxu0
    %v430 = vpop.f32.mrb[0].mxu0
    %431 = vdwg.mxu0
    %433 = vrot.lane.b32.xlu0 %v233, 96
    %v434 = vpop.permute.xlu0 %433
    %v436 = vsel %vm287, %v205, 0
    %v439 = vsel %vm287, %v434, 0
    %441 = vmatprep.subr.bf16.mxu0 0
    %442 = vmatpush1.bf16.xpose.msra.mxu0 %v439
    %443 = vmatprep.subr.bf16.mxu0 0
    %444 = vmatpush1.bf16.xpose.msra.mxu0 0
    %445 = vmatprep.subr.bf16.mxu0 0
    %446 = vmatpush1.bf16.xpose.msra.mxu0 0
    %447 = vmatprep.subr.bf16.mxu0 0
    %448 = vmatpush1.bf16.xpose.msra.mxu0 0
    %449 = vmatprep.subr.bf16.mxu0 0
    %450 = vmatpush1.bf16.xpose.msra.mxu0 0
    %451 = vmatprep.subr.bf16.mxu0 0
    %452 = vmatpush1.bf16.xpose.msra.mxu0 0
    %453 = vmatprep.subr.bf16.mxu0 0
    %454 = vmatpush1.bf16.xpose.msra.mxu0 0
    %455 = vmatprep.subr.bf16.mxu0 0
    %456 = vmatpush1.bf16.xpose.msra.mxu0 0
    %457 = vmatprep.subr.bf16.mxu0 0
    %458 = vmatpush1.bf16.xpose.msra.mxu0 0
    %459 = vmatprep.subr.bf16.mxu0 0
    %460 = vmatpush1.bf16.xpose.msra.mxu0 0
    %461 = vmatprep.subr.bf16.mxu0 0
    %462 = vmatpush1.bf16.xpose.msra.mxu0 0
    %463 = vmatprep.subr.bf16.mxu0 0
    %464 = vmatpush1.bf16.xpose.msra.mxu0 0
    %465 = vmatprep.subr.bf16.mxu0 0
    %466 = vmatpush1.bf16.xpose.msra.mxu0 0
    %467 = vmatprep.subr.bf16.mxu0 0
    %468 = vmatpush1.bf16.xpose.msra.mxu0 0
    %469 = vmatprep.subr.bf16.mxu0 0
    %470 = vmatpush1.bf16.xpose.msra.mxu0 0
    %471 = vmatprep.subr.bf16.mxu0 0
    %472 = vmatpush1.bf16.xpose.msra.mxu0 0
    %473 = vmatprep.mubr.bf16.mxu0 0
    %474 = vmatmul.mubr.bf16.gmra.mrb[0].mxu0 %v436
    %v475 = vpop.f32.mrb[0].mxu0
    %v476 = vadd.f32 0.0, %v475
    %v477 = vpop.f32.mrb[0].mxu0
    %v478 = vpop.f32.mrb[0].mxu0
    %v479 = vpop.f32.mrb[0].mxu0
    %480 = vdwg.mxu0
    %482 = vrot.lane.b32.xlu0 %v234, 96
    %v483 = vpop.permute.xlu0 %482
    %v485 = vsel %vm287, %v206, 0
    %v488 = vsel %vm287, %v483, 0
    %490 = vmatprep.subr.bf16.mxu0 0
    %491 = vmatpush1.bf16.xpose.msra.mxu0 %v488
    %492 = vmatprep.subr.bf16.mxu0 0
    %493 = vmatpush1.bf16.xpose.msra.mxu0 0
    %494 = vmatprep.subr.bf16.mxu0 0
    %495 = vmatpush1.bf16.xpose.msra.mxu0 0
    %496 = vmatprep.subr.bf16.mxu0 0
    %497 = vmatpush1.bf16.xpose.msra.mxu0 0
    %498 = vmatprep.subr.bf16.mxu0 0
    %499 = vmatpush1.bf16.xpose.msra.mxu0 0
    %500 = vmatprep.subr.bf16.mxu0 0
    %501 = vmatpush1.bf16.xpose.msra.mxu0 0
    %502 = vmatprep.subr.bf16.mxu0 0
    %503 = vmatpush1.bf16.xpose.msra.mxu0 0
    %504 = vmatprep.subr.bf16.mxu0 0
    %505 = vmatpush1.bf16.xpose.msra.mxu0 0
    %506 = vmatprep.subr.bf16.mxu0 0
    %507 = vmatpush1.bf16.xpose.msra.mxu0 0
    %508 = vmatprep.subr.bf16.mxu0 0
    %509 = vmatpush1.bf16.xpose.msra.mxu0 0
    %510 = vmatprep.subr.bf16.mxu0 0
    %511 = vmatpush1.bf16.xpose.msra.mxu0 0
    %512 = vmatprep.subr.bf16.mxu0 0
    %513 = vmatpush1.bf16.xpose.msra.mxu0 0
    %514 = vmatprep.subr.bf16.mxu0 0
    %515 = vmatpush1.bf16.xpose.msra.mxu0 0
    %516 = vmatprep.subr.bf16.mxu0 0
    %517 = vmatpush1.bf16.xpose.msra.mxu0 0
    %518 = vmatprep.subr.bf16.mxu0 0
    %519 = vmatpush1.bf16.xpose.msra.mxu0 0
    %520 = vmatprep.subr.bf16.mxu0 0
    %521 = vmatpush1.bf16.xpose.msra.mxu0 0
    %522 = vmatprep.mubr.bf16.mxu0 0
    %523 = vmatmul.mubr.bf16.gmra.mrb[0].mxu0 %v485
    %v524 = vpop.f32.mrb[0].mxu0
    %v525 = vadd.f32 0.0, %v524
    %v526 = vpop.f32.mrb[0].mxu0
    %v527 = vpop.f32.mrb[0].mxu0
    %v528 = vpop.f32.mrb[0].mxu0
    %529 = vdwg.mxu0
    %531 = vrot.lane.b32.xlu0 %v235, 96
    %v532 = vpop.permute.xlu0 %531
    %v534 = vsel %vm287, %v207, 0
    %v537 = vsel %vm287, %v532, 0
    %539 = vmatprep.subr.bf16.mxu0 0
    %540 = vmatpush1.bf16.xpose.msra.mxu0 %v537
    %541 = vmatprep.subr.bf16.mxu0 0
    %542 = vmatpush1.bf16.xpose.msra.mxu0 0
    %543 = vmatprep.subr.bf16.mxu0 0
    %544 = vmatpush1.bf16.xpose.msra.mxu0 0
    %545 = vmatprep.subr.bf16.mxu0 0
    %546 = vmatpush1.bf16.xpose.msra.mxu0 0
    %547 = vmatprep.subr.bf16.mxu0 0
    %548 = vmatpush1.bf16.xpose.msra.mxu0 0
    %549 = vmatprep.subr.bf16.mxu0 0
    %550 = vmatpush1.bf16.xpose.msra.mxu0 0
    %551 = vmatprep.subr.bf16.mxu0 0
    %552 = vmatpush1.bf16.xpose.msra.mxu0 0
    %553 = vmatprep.subr.bf16.mxu0 0
    %554 = vmatpush1.bf16.xpose.msra.mxu0 0
    %555 = vmatprep.subr.bf16.mxu0 0
    %556 = vmatpush1.bf16.xpose.msra.mxu0 0
    %557 = vmatprep.subr.bf16.mxu0 0
    %558 = vmatpush1.bf16.xpose.msra.mxu0 0
    %559 = vmatprep.subr.bf16.mxu0 0
    %560 = vmatpush1.bf16.xpose.msra.mxu0 0
    %561 = vmatprep.subr.bf16.mxu0 0
    %562 = vmatpush1.bf16.xpose.msra.mxu0 0
    %563 = vmatprep.subr.bf16.mxu0 0
    %564 = vmatpush1.bf16.xpose.msra.mxu0 0
    %565 = vmatprep.subr.bf16.mxu0 0
    %566 = vmatpush1.bf16.xpose.msra.mxu0 0
    %567 = vmatprep.subr.bf16.mxu0 0
    %568 = vmatpush1.bf16.xpose.msra.mxu0 0
    %569 = vmatprep.subr.bf16.mxu0 0
    %570 = vmatpush1.bf16.xpose.msra.mxu0 0
    %571 = vmatprep.mubr.bf16.mxu0 0
    %572 = vmatmul.mubr.bf16.gmra.mrb[0].mxu0 %v534
    %v573 = vpop.f32.mrb[0].mxu0
    %v574 = vadd.f32 0.0, %v573
    %v575 = vpop.f32.mrb[0].mxu0
    %v576 = vpop.f32.mrb[0].mxu0
    %v577 = vpop.f32.mrb[0].mxu0
    %578 = vdwg.mxu0
    %580 = vrot.lane.b32.xlu0 %v236, 96
    %v581 = vpop.permute.xlu0 %580
    %v583 = vsel %vm287, %v208, 0
    %v586 = vsel %vm287, %v581, 0
    %588 = vmatprep.subr.bf16.mxu0 0
    %589 = vmatpush1.bf16.xpose.msra.mxu0 %v586
    %590 = vmatprep.subr.bf16.mxu0 0
    %591 = vmatpush1.bf16.xpose.msra.mxu0 0
    %592 = vmatprep.subr.bf16.mxu0 0
    %593 = vmatpush1.bf16.xpose.msra.mxu0 0
    %594 = vmatprep.subr.bf16.mxu0 0
    %595 = vmatpush1.bf16.xpose.msra.mxu0 0
    %596 = vmatprep.subr.bf16.mxu0 0
    %597 = vmatpush1.bf16.xpose.msra.mxu0 0
    %598 = vmatprep.subr.bf16.mxu0 0
    %599 = vmatpush1.bf16.xpose.msra.mxu0 0
    %600 = vmatprep.subr.bf16.mxu0 0
    %601 = vmatpush1.bf16.xpose.msra.mxu0 0
    %602 = vmatprep.subr.bf16.mxu0 0
    %603 = vmatpush1.bf16.xpose.msra.mxu0 0
    %604 = vmatprep.subr.bf16.mxu0 0
    %605 = vmatpush1.bf16.xpose.msra.mxu0 0
    %606 = vmatprep.subr.bf16.mxu0 0
    %607 = vmatpush1.bf16.xpose.msra.mxu0 0
    %608 = vmatprep.subr.bf16.mxu0 0
    %609 = vmatpush1.bf16.xpose.msra.mxu0 0
    %610 = vmatprep.subr.bf16.mxu0 0
    %611 = vmatpush1.bf16.xpose.msra.mxu0 0
    %612 = vmatprep.subr.bf16.mxu0 0
    %613 = vmatpush1.bf16.xpose.msra.mxu0 0
    %614 = vmatprep.subr.bf16.mxu0 0
    %615 = vmatpush1.bf16.xpose.msra.mxu0 0
    %616 = vmatprep.subr.bf16.mxu0 0
    %617 = vmatpush1.bf16.xpose.msra.mxu0 0
    %618 = vmatprep.subr.bf16.mxu0 0
    %619 = vmatpush1.bf16.xpose.msra.mxu0 0
    %620 = vmatprep.mubr.bf16.mxu0 0
    %621 = vmatmul.mubr.bf16.gmra.mrb[0].mxu0 %v583
    %v622 = vpop.f32.mrb[0].mxu0
    %v623 = vadd.f32 0.0, %v622
    %v624 = vpop.f32.mrb[0].mxu0
    %v625 = vpop.f32.mrb[0].mxu0
    %v626 = vpop.f32.mrb[0].mxu0
    %627 = vdwg.mxu0
    %629 = vrot.lane.b32.xlu0 %v237, 96
    %v630 = vpop.permute.xlu0 %629
    %v632 = vsel %vm287, %v209, 0
    %v635 = vsel %vm287, %v630, 0
    %637 = vmatprep.subr.bf16.mxu0 0
    %638 = vmatpush1.bf16.xpose.msra.mxu0 %v635
    %639 = vmatprep.subr.bf16.mxu0 0
    %640 = vmatpush1.bf16.xpose.msra.mxu0 0
    %641 = vmatprep.subr.bf16.mxu0 0
    %642 = vmatpush1.bf16.xpose.msra.mxu0 0
    %643 = vmatprep.subr.bf16.mxu0 0
    %644 = vmatpush1.bf16.xpose.msra.mxu0 0
    %645 = vmatprep.subr.bf16.mxu0 0
    %646 = vmatpush1.bf16.xpose.msra.mxu0 0
    %647 = vmatprep.subr.bf16.mxu0 0
    %648 = vmatpush1.bf16.xpose.msra.mxu0 0
    %649 = vmatprep.subr.bf16.mxu0 0
    %650 = vmatpush1.bf16.xpose.msra.mxu0 0
    %651 = vmatprep.subr.bf16.mxu0 0
    %652 = vmatpush1.bf16.xpose.msra.mxu0 0
    %653 = vmatprep.subr.bf16.mxu0 0
    %654 = vmatpush1.bf16.xpose.msra.mxu0 0
    %655 = vmatprep.subr.bf16.mxu0 0
    %656 = vmatpush1.bf16.xpose.msra.mxu0 0
    %657 = vmatprep.subr.bf16.mxu0 0
    %658 = vmatpush1.bf16.xpose.msra.mxu0 0
    %659 = vmatprep.subr.bf16.mxu0 0
    %660 = vmatpush1.bf16.xpose.msra.mxu0 0
    %661 = vmatprep.subr.bf16.mxu0 0
    %662 = vmatpush1.bf16.xpose.msra.mxu0 0
    %663 = vmatprep.subr.bf16.mxu0 0
    %664 = vmatpush1.bf16.xpose.msra.mxu0 0
    %665 = vmatprep.subr.bf16.mxu0 0
    %666 = vmatpush1.bf16.xpose.msra.mxu0 0
    %667 = vmatprep.subr.bf16.mxu0 0
    %668 = vmatpush1.bf16.xpose.msra.mxu0 0
    %669 = vmatprep.mubr.bf16.mxu0 0
    %670 = vmatmul.mubr.bf16.gmra.mrb[0].mxu0 %v632
    %v671 = vpop.f32.mrb[0].mxu0
    %v672 = vadd.f32 0.0, %v671
    %v673 = vpop.f32.mrb[0].mxu0
    %v674 = vpop.f32.mrb[0].mxu0
    %v675 = vpop.f32.mrb[0].mxu0
    %676 = vdwg.mxu0
    %v677 = vsel %vm287, %v329, -inf
    %678 = vmax.xlane.f32.xlu0 %v677
    %v679 = vpop.xlane.xlu0 %678
    %v680 = vsel %vm287, %v378, -inf
    %681 = vmax.xlane.f32.xlu0 %v680
    %v682 = vpop.xlane.xlu0 %681
    %v683 = vsel %vm287, %v427, -inf
    %684 = vmax.xlane.f32.xlu0 %v683
    %v685 = vpop.xlane.xlu0 %684
    %v686 = vsel %vm287, %v476, -inf
    %687 = vmax.xlane.f32.xlu0 %v686
    %v688 = vpop.xlane.xlu0 %687
    %v689 = vsel %vm287, %v525, -inf
    %690 = vmax.xlane.f32.xlu0 %v689
    %v691 = vpop.xlane.xlu0 %690
    %v692 = vsel %vm287, %v574, -inf
    %693 = vmax.xlane.f32.xlu0 %v692
    %v694 = vpop.xlane.xlu0 %693
    %v695 = vsel %vm287, %v623, -inf
    %696 = vmax.xlane.f32.xlu0 %v695
    %v697 = vpop.xlane.xlu0 %696
    %v698 = vsel %vm287, %v672, -inf
    %699 = vmax.xlane.f32.xlu0 %v698
    %v700 = vpop.xlane.xlu0 %699
    %v701 = vsub.f32 %v329, %v679
    %v702 = vsub.f32 %v378, %v682
    %v703 = vsub.f32 %v427, %v685
    %v704 = vsub.f32 %v476, %v688
    %v705 = vsub.f32 %v525, %v691
    %v706 = vsub.f32 %v574, %v694
    %v707 = vsub.f32 %v623, %v697
    %v708 = vsub.f32 %v672, %v700
    %v709 = vmul.f32 %v701, 1.442695
    %v710 = vpow.pop %v709
    %v711 = vmul.f32 %v702, 1.442695
    %v712 = vpow.pop %v711
    %v713 = vmul.f32 %v703, 1.442695
    %v714 = vpow.pop %v713
    %v715 = vmul.f32 %v704, 1.442695
    %v716 = vpow.pop %v715
    %v717 = vmul.f32 %v705, 1.442695
    %v718 = vpow.pop %v717
    %v719 = vmul.f32 %v706, 1.442695
    %v720 = vpow.pop %v719
    %v721 = vmul.f32 %v707, 1.442695
    %v722 = vpow.pop %v721
    %v723 = vmul.f32 %v708, 1.442695
    %v724 = vpow.pop %v723
    %v725 = vsel %vm287, %v710, 0.0
    %726 = vadd.xlane.f32.xlu0 %v725
    %v727 = vpop.xlane.xlu0 %726
    %v728 = vsel %vm287, %v712, 0.0
    %729 = vadd.xlane.f32.xlu0 %v728
    %v730 = vpop.xlane.xlu0 %729
    %v731 = vsel %vm287, %v714, 0.0
    %732 = vadd.xlane.f32.xlu0 %v731
    %v733 = vpop.xlane.xlu0 %732
    %v734 = vsel %vm287, %v716, 0.0
    %735 = vadd.xlane.f32.xlu0 %v734
    %v736 = vpop.xlane.xlu0 %735
    %v737 = vsel %vm287, %v718, 0.0
    %738 = vadd.xlane.f32.xlu0 %v737
    %v739 = vpop.xlane.xlu0 %738
    %v740 = vsel %vm287, %v720, 0.0
    %741 = vadd.xlane.f32.xlu0 %v740
    %v742 = vpop.xlane.xlu0 %741
    %v743 = vsel %vm287, %v722, 0.0
    %744 = vadd.xlane.f32.xlu0 %v743
    %v745 = vpop.xlane.xlu0 %744
    %v746 = vsel %vm287, %v724, 0.0
    %747 = vadd.xlane.f32.xlu0 %v746
    %v748 = vpop.xlane.xlu0 %747
    %v749 = vrcp.pop %v727
    %v750 = vrcp.pop %v730
    %v751 = vrcp.pop %v733
    %v752 = vrcp.pop %v736
    %v753 = vrcp.pop %v739
    %v754 = vrcp.pop %v742
    %v755 = vrcp.pop %v745
    %v756 = vrcp.pop %v748
    %v757 = vmul.f32 %v710, %v749
    %v758 = vmul.f32 %v712, %v750
    %v759 = vmul.f32 %v714, %v751
    %v760 = vmul.f32 %v716, %v752
    %v761 = vmul.f32 %v718, %v753
    %v762 = vmul.f32 %v720, %v754
    %v763 = vmul.f32 %v722, %v755
    %v764 = vmul.f32 %v724, %v756
    %v765 = vpack.c.bf16 %v757, %v757
    %v766 = vpack.c.bf16 %v758, %v758
    %v767 = vpack.c.bf16 %v759, %v759
    %v768 = vpack.c.bf16 %v760, %v760
    %v769 = vpack.c.bf16 %v761, %v761
    %v770 = vpack.c.bf16 %v762, %v762
    %v771 = vpack.c.bf16 %v763, %v763
    %v772 = vpack.c.bf16 %v764, %v764
    %v774 = vsel %vm287, %v765, 0
    %vm776 = vcmask 1043456
    %v778 = vsel %vm776, %v276, 0
    %780 = vmatprep.subr.bf16.mxu0 0
    %781 = vmatpush1.bf16.msra.mxu0 %v778
    %782 = vmatprep.subr.bf16.mxu0 0
    %783 = vmatpush1.bf16.msra.mxu0 0
    %784 = vmatprep.subr.bf16.mxu0 0
    %785 = vmatpush1.bf16.msra.mxu0 0
    %786 = vmatprep.subr.bf16.mxu0 0
    %787 = vmatpush1.bf16.msra.mxu0 0
    %788 = vmatprep.subr.bf16.mxu0 0
    %789 = vmatpush1.bf16.msra.mxu0 0
    %790 = vmatprep.subr.bf16.mxu0 0
    %791 = vmatpush1.bf16.msra.mxu0 0
    %792 = vmatprep.subr.bf16.mxu0 0
    %793 = vmatpush1.bf16.msra.mxu0 0
    %794 = vmatprep.subr.bf16.mxu0 0
    %795 = vmatpush1.bf16.msra.mxu0 0
    %796 = vmatprep.subr.bf16.mxu0 0
    %797 = vmatpush1.bf16.msra.mxu0 0
    %798 = vmatprep.subr.bf16.mxu0 0
    %799 = vmatpush1.bf16.msra.mxu0 0
    %800 = vmatprep.subr.bf16.mxu0 0
    %801 = vmatpush1.bf16.msra.mxu0 0
    %802 = vmatprep.subr.bf16.mxu0 0
    %803 = vmatpush1.bf16.msra.mxu0 0
    %804 = vmatprep.subr.bf16.mxu0 0
    %805 = vmatpush1.bf16.msra.mxu0 0
    %806 = vmatprep.subr.bf16.mxu0 0
    %807 = vmatpush1.bf16.msra.mxu0 0
    %808 = vmatprep.subr.bf16.mxu0 0
    %809 = vmatpush1.bf16.msra.mxu0 0
    %810 = vmatprep.subr.bf16.mxu0 0
    %811 = vmatpush1.bf16.msra.mxu0 0
    %812 = vmatprep.mubr.bf16.mxu0 0
    %813 = vmatmul.mubr.bf16.gmra.mrb[0].mxu0 %v774
    %v814 = vpop.f32.mrb[0].mxu0
    %v815 = vadd.f32 0.0, %v814
    %v816 = vpop.f32.mrb[0].mxu0
    %v817 = vpop.f32.mrb[0].mxu0
    %v818 = vpop.f32.mrb[0].mxu0
    %819 = vdwg.mxu0
    %v821 = vsel %vm287, %v766, 0
    %v824 = vsel %vm776, %v277, 0
    %826 = vmatprep.subr.bf16.mxu0 0
    %827 = vmatpush1.bf16.msra.mxu0 %v824
    %828 = vmatprep.subr.bf16.mxu0 0
    %829 = vmatpush1.bf16.msra.mxu0 0
    %830 = vmatprep.subr.bf16.mxu0 0
    %831 = vmatpush1.bf16.msra.mxu0 0
    %832 = vmatprep.subr.bf16.mxu0 0
    %833 = vmatpush1.bf16.msra.mxu0 0
    %834 = vmatprep.subr.bf16.mxu0 0
    %835 = vmatpush1.bf16.msra.mxu0 0
    %836 = vmatprep.subr.bf16.mxu0 0
    %837 = vmatpush1.bf16.msra.mxu0 0
    %838 = vmatprep.subr.bf16.mxu0 0
    %839 = vmatpush1.bf16.msra.mxu0 0
    %840 = vmatprep.subr.bf16.mxu0 0
    %841 = vmatpush1.bf16.msra.mxu0 0
    %842 = vmatprep.subr.bf16.mxu0 0
    %843 = vmatpush1.bf16.msra.mxu0 0
    %844 = vmatprep.subr.bf16.mxu0 0
    %845 = vmatpush1.bf16.msra.mxu0 0
    %846 = vmatprep.subr.bf16.mxu0 0
    %847 = vmatpush1.bf16.msra.mxu0 0
    %848 = vmatprep.subr.bf16.mxu0 0
    %849 = vmatpush1.bf16.msra.mxu0 0
    %850 = vmatprep.subr.bf16.mxu0 0
    %851 = vmatpush1.bf16.msra.mxu0 0
    %852 = vmatprep.subr.bf16.mxu0 0
    %853 = vmatpush1.bf16.msra.mxu0 0
    %854 = vmatprep.subr.bf16.mxu0 0
    %855 = vmatpush1.bf16.msra.mxu0 0
    %856 = vmatprep.subr.bf16.mxu0 0
    %857 = vmatpush1.bf16.msra.mxu0 0
    %858 = vmatprep.mubr.bf16.mxu0 0
    %859 = vmatmul.mubr.bf16.gmra.mrb[0].mxu0 %v821
    %v860 = vpop.f32.mrb[0].mxu0
    %v861 = vadd.f32 0.0, %v860
    %v862 = vpop.f32.mrb[0].mxu0
    %v863 = vpop.f32.mrb[0].mxu0
    %v864 = vpop.f32.mrb[0].mxu0
    %865 = vdwg.mxu0
    %v867 = vsel %vm287, %v767, 0
    %v870 = vsel %vm776, %v278, 0
    %872 = vmatprep.subr.bf16.mxu0 0
    %873 = vmatpush1.bf16.msra.mxu0 %v870
    %874 = vmatprep.subr.bf16.mxu0 0
    %875 = vmatpush1.bf16.msra.mxu0 0
    %876 = vmatprep.subr.bf16.mxu0 0
    %877 = vmatpush1.bf16.msra.mxu0 0
    %878 = vmatprep.subr.bf16.mxu0 0
    %879 = vmatpush1.bf16.msra.mxu0 0
    %880 = vmatprep.subr.bf16.mxu0 0
    %881 = vmatpush1.bf16.msra.mxu0 0
    %882 = vmatprep.subr.bf16.mxu0 0
    %883 = vmatpush1.bf16.msra.mxu0 0
    %884 = vmatprep.subr.bf16.mxu0 0
    %885 = vmatpush1.bf16.msra.mxu0 0
    %886 = vmatprep.subr.bf16.mxu0 0
    %887 = vmatpush1.bf16.msra.mxu0 0
    %888 = vmatprep.subr.bf16.mxu0 0
    %889 = vmatpush1.bf16.msra.mxu0 0
    %890 = vmatprep.subr.bf16.mxu0 0
    %891 = vmatpush1.bf16.msra.mxu0 0
    %892 = vmatprep.subr.bf16.mxu0 0
    %893 = vmatpush1.bf16.msra.mxu0 0
    %894 = vmatprep.subr.bf16.mxu0 0
    %895 = vmatpush1.bf16.msra.mxu0 0
    %896 = vmatprep.subr.bf16.mxu0 0
    %897 = vmatpush1.bf16.msra.mxu0 0
    %898 = vmatprep.subr.bf16.mxu0 0
    %899 = vmatpush1.bf16.msra.mxu0 0
    %900 = vmatprep.subr.bf16.mxu0 0
    %901 = vmatpush1.bf16.msra.mxu0 0
    %902 = vmatprep.subr.bf16.mxu0 0
    %903 = vmatpush1.bf16.msra.mxu0 0
    %904 = vmatprep.mubr.bf16.mxu0 0
    %905 = vmatmul.mubr.bf16.gmra.mrb[0].mxu0 %v867
    %v906 = vpop.f32.mrb[0].mxu0
    %v907 = vadd.f32 0.0, %v906
    %v908 = vpop.f32.mrb[0].mxu0
    %v909 = vpop.f32.mrb[0].mxu0
    %v910 = vpop.f32.mrb[0].mxu0
    %911 = vdwg.mxu0
    %v913 = vsel %vm287, %v768, 0
    %v916 = vsel %vm776, %v279, 0
    %918 = vmatprep.subr.bf16.mxu0 0
    %919 = vmatpush1.bf16.msra.mxu0 %v916
    %920 = vmatprep.subr.bf16.mxu0 0
    %921 = vmatpush1.bf16.msra.mxu0 0
    %922 = vmatprep.subr.bf16.mxu0 0
    %923 = vmatpush1.bf16.msra.mxu0 0
    %924 = vmatprep.subr.bf16.mxu0 0
    %925 = vmatpush1.bf16.msra.mxu0 0
    %926 = vmatprep.subr.bf16.mxu0 0
    %927 = vmatpush1.bf16.msra.mxu0 0
    %928 = vmatprep.subr.bf16.mxu0 0
    %929 = vmatpush1.bf16.msra.mxu0 0
    %930 = vmatprep.subr.bf16.mxu0 0
    %931 = vmatpush1.bf16.msra.mxu0 0
    %932 = vmatprep.subr.bf16.mxu0 0
    %933 = vmatpush1.bf16.msra.mxu0 0
    %934 = vmatprep.subr.bf16.mxu0 0
    %935 = vmatpush1.bf16.msra.mxu0 0
    %936 = vmatprep.subr.bf16.mxu0 0
    %937 = vmatpush1.bf16.msra.mxu0 0
    %938 = vmatprep.subr.bf16.mxu0 0
    %939 = vmatpush1.bf16.msra.mxu0 0
    %940 = vmatprep.subr.bf16.mxu0 0
    %941 = vmatpush1.bf16.msra.mxu0 0
    %942 = vmatprep.subr.bf16.mxu0 0
    %943 = vmatpush1.bf16.msra.mxu0 0
    %944 = vmatprep.subr.bf16.mxu0 0
    %945 = vmatpush1.bf16.msra.mxu0 0
    %946 = vmatprep.subr.bf16.mxu0 0
    %947 = vmatpush1.bf16.msra.mxu0 0
    %948 = vmatprep.subr.bf16.mxu0 0
    %949 = vmatpush1.bf16.msra.mxu0 0
    %950 = vmatprep.mubr.bf16.mxu0 0
    %951 = vmatmul.mubr.bf16.gmra.mrb[0].mxu0 %v913
    %v952 = vpop.f32.mrb[0].mxu0
    %v953 = vadd.f32 0.0, %v952
    %v954 = vpop.f32.mrb[0].mxu0
    %v955 = vpop.f32.mrb[0].mxu0
    %v956 = vpop.f32.mrb[0].mxu0
    %957 = vdwg.mxu0
    %v959 = vsel %vm287, %v769, 0
    %v962 = vsel %vm776, %v280, 0
    %964 = vmatprep.subr.bf16.mxu0 0
    %965 = vmatpush1.bf16.msra.mxu0 %v962
    %966 = vmatprep.subr.bf16.mxu0 0
    %967 = vmatpush1.bf16.msra.mxu0 0
    %968 = vmatprep.subr.bf16.mxu0 0
    %969 = vmatpush1.bf16.msra.mxu0 0
    %970 = vmatprep.subr.bf16.mxu0 0
    %971 = vmatpush1.bf16.msra.mxu0 0
    %972 = vmatprep.subr.bf16.mxu0 0
    %973 = vmatpush1.bf16.msra.mxu0 0
    %974 = vmatprep.subr.bf16.mxu0 0
    %975 = vmatpush1.bf16.msra.mxu0 0
    %976 = vmatprep.subr.bf16.mxu0 0
    %977 = vmatpush1.bf16.msra.mxu0 0
    %978 = vmatprep.subr.bf16.mxu0 0
    %979 = vmatpush1.bf16.msra.mxu0 0
    %980 = vmatprep.subr.bf16.mxu0 0
    %981 = vmatpush1.bf16.msra.mxu0 0
    %982 = vmatprep.subr.bf16.mxu0 0
    %983 = vmatpush1.bf16.msra.mxu0 0
    %984 = vmatprep.subr.bf16.mxu0 0
    %985 = vmatpush1.bf16.msra.mxu0 0
    %986 = vmatprep.subr.bf16.mxu0 0
    %987 = vmatpush1.bf16.msra.mxu0 0
    %988 = vmatprep.subr.bf16.mxu0 0
    %989 = vmatpush1.bf16.msra.mxu0 0
    %990 = vmatprep.subr.bf16.mxu0 0
    %991 = vmatpush1.bf16.msra.mxu0 0
    %992 = vmatprep.subr.bf16.mxu0 0
    %993 = vmatpush1.bf16.msra.mxu0 0
    %994 = vmatprep.subr.bf16.mxu0 0
    %995 = vmatpush1.bf16.msra.mxu0 0
    %996 = vmatprep.mubr.bf16.mxu0 0
    %997 = vmatmul.mubr.bf16.gmra.mrb[0].mxu0 %v959
    %v998 = vpop.f32.mrb[0].mxu0
    %v999 = vadd.f32 0.0, %v998
    %v1000 = vpop.f32.mrb[0].mxu0
    %v1001 = vpop.f32.mrb[0].mxu0
    %v1002 = vpop.f32.mrb[0].mxu0
    %1003 = vdwg.mxu0
    %v1005 = vsel %vm287, %v770, 0
    %v1008 = vsel %vm776, %v281, 0
    %1010 = vmatprep.subr.bf16.mxu0 0
    %1011 = vmatpush1.bf16.msra.mxu0 %v1008
    %1012 = vmatprep.subr.bf16.mxu0 0
    %1013 = vmatpush1.bf16.msra.mxu0 0
    %1014 = vmatprep.subr.bf16.mxu0 0
    %1015 = vmatpush1.bf16.msra.mxu0 0
    %1016 = vmatprep.subr.bf16.mxu0 0
    %1017 = vmatpush1.bf16.msra.mxu0 0
    %1018 = vmatprep.subr.bf16.mxu0 0
    %1019 = vmatpush1.bf16.msra.mxu0 0
    %1020 = vmatprep.subr.bf16.mxu0 0
    %1021 = vmatpush1.bf16.msra.mxu0 0
    %1022 = vmatprep.subr.bf16.mxu0 0
    %1023 = vmatpush1.bf16.msra.mxu0 0
    %1024 = vmatprep.subr.bf16.mxu0 0
    %1025 = vmatpush1.bf16.msra.mxu0 0
    %1026 = vmatprep.subr.bf16.mxu0 0
    %1027 = vmatpush1.bf16.msra.mxu0 0
    %1028 = vmatprep.subr.bf16.mxu0 0
    %1029 = vmatpush1.bf16.msra.mxu0 0
    %1030 = vmatprep.subr.bf16.mxu0 0
    %1031 = vmatpush1.bf16.msra.mxu0 0
    %1032 = vmatprep.subr.bf16.mxu0 0
    %1033 = vmatpush1.bf16.msra.mxu0 0
    %1034 = vmatprep.subr.bf16.mxu0 0
    %1035 = vmatpush1.bf16.msra.mxu0 0
    %1036 = vmatprep.subr.bf16.mxu0 0
    %1037 = vmatpush1.bf16.msra.mxu0 0
    %1038 = vmatprep.subr.bf16.mxu0 0
    %1039 = vmatpush1.bf16.msra.mxu0 0
    %1040 = vmatprep.subr.bf16.mxu0 0
    %1041 = vmatpush1.bf16.msra.mxu0 0
    %1042 = vmatprep.mubr.bf16.mxu0 0
    %1043 = vmatmul.mubr.bf16.gmra.mrb[0].mxu0 %v1005
    %v1044 = vpop.f32.mrb[0].mxu0
    %v1045 = vadd.f32 0.0, %v1044
    %v1046 = vpop.f32.mrb[0].mxu0
    %v1047 = vpop.f32.mrb[0].mxu0
    %v1048 = vpop.f32.mrb[0].mxu0
    %1049 = vdwg.mxu0
    %v1051 = vsel %vm287, %v771, 0
    %v1054 = vsel %vm776, %v282, 0
    %1056 = vmatprep.subr.bf16.mxu0 0
    %1057 = vmatpush1.bf16.msra.mxu0 %v1054
    %1058 = vmatprep.subr.bf16.mxu0 0
    %1059 = vmatpush1.bf16.msra.mxu0 0
    %1060 = vmatprep.subr.bf16.mxu0 0
    %1061 = vmatpush1.bf16.msra.mxu0 0
    %1062 = vmatprep.subr.bf16.mxu0 0
    %1063 = vmatpush1.bf16.msra.mxu0 0
    %1064 = vmatprep.subr.bf16.mxu0 0
    %1065 = vmatpush1.bf16.msra.mxu0 0
    %1066 = vmatprep.subr.bf16.mxu0 0
    %1067 = vmatpush1.bf16.msra.mxu0 0
    %1068 = vmatprep.subr.bf16.mxu0 0
    %1069 = vmatpush1.bf16.msra.mxu0 0
    %1070 = vmatprep.subr.bf16.mxu0 0
    %1071 = vmatpush1.bf16.msra.mxu0 0
    %1072 = vmatprep.subr.bf16.mxu0 0
    %1073 = vmatpush1.bf16.msra.mxu0 0
    %1074 = vmatprep.subr.bf16.mxu0 0
    %1075 = vmatpush1.bf16.msra.mxu0 0
    %1076 = vmatprep.subr.bf16.mxu0 0
    %1077 = vmatpush1.bf16.msra.mxu0 0
    %1078 = vmatprep.subr.bf16.mxu0 0
    %1079 = vmatpush1.bf16.msra.mxu0 0
    %1080 = vmatprep.subr.bf16.mxu0 0
    %1081 = vmatpush1.bf16.msra.mxu0 0
    %1082 = vmatprep.subr.bf16.mxu0 0
    %1083 = vmatpush1.bf16.msra.mxu0 0
    %1084 = vmatprep.subr.bf16.mxu0 0
    %1085 = vmatpush1.bf16.msra.mxu0 0
    %1086 = vmatprep.subr.bf16.mxu0 0
    %1087 = vmatpush1.bf16.msra.mxu0 0
    %1088 = vmatprep.mubr.bf16.mxu0 0
    %1089 = vmatmul.mubr.bf16.gmra.mrb[0].mxu0 %v1051
    %v1090 = vpop.f32.mrb[0].mxu0
    %v1091 = vadd.f32 0.0, %v1090
    %v1092 = vpop.f32.mrb[0].mxu0
    %v1093 = vpop.f32.mrb[0].mxu0
    %v1094 = vpop.f32.mrb[0].mxu0
    %1095 = vdwg.mxu0
    %v1097 = vsel %vm287, %v772, 0
    %v1100 = vsel %vm776, %v283, 0
    %1102 = vmatprep.subr.bf16.mxu0 0
    %1103 = vmatpush1.bf16.msra.mxu0 %v1100
    %1104 = vmatprep.subr.bf16.mxu0 0
    %1105 = vmatpush1.bf16.msra.mxu0 0
    %1106 = vmatprep.subr.bf16.mxu0 0
    %1107 = vmatpush1.bf16.msra.mxu0 0
    %1108 = vmatprep.subr.bf16.mxu0 0
    %1109 = vmatpush1.bf16.msra.mxu0 0
    %1110 = vmatprep.subr.bf16.mxu0 0
    %1111 = vmatpush1.bf16.msra.mxu0 0
    %1112 = vmatprep.subr.bf16.mxu0 0
    %1113 = vmatpush1.bf16.msra.mxu0 0
    %1114 = vmatprep.subr.bf16.mxu0 0
    %1115 = vmatpush1.bf16.msra.mxu0 0
    %1116 = vmatprep.subr.bf16.mxu0 0
    %1117 = vmatpush1.bf16.msra.mxu0 0
    %1118 = vmatprep.subr.bf16.mxu0 0
    %1119 = vmatpush1.bf16.msra.mxu0 0
    %1120 = vmatprep.subr.bf16.mxu0 0
    %1121 = vmatpush1.bf16.msra.mxu0 0
    %1122 = vmatprep.subr.bf16.mxu0 0
    %1123 = vmatpush1.bf16.msra.mxu0 0
    %1124 = vmatprep.subr.bf16.mxu0 0
    %1125 = vmatpush1.bf16.msra.mxu0 0
    %1126 = vmatprep.subr.bf16.mxu0 0
    %1127 = vmatpush1.bf16.msra.mxu0 0
    %1128 = vmatprep.subr.bf16.mxu0 0
    %1129 = vmatpush1.bf16.msra.mxu0 0
    %1130 = vmatprep.subr.bf16.mxu0 0
    %1131 = vmatpush1.bf16.msra.mxu0 0
    %1132 = vmatprep.subr.bf16.mxu0 0
    %1133 = vmatpush1.bf16.msra.mxu0 0
    %1134 = vmatprep.mubr.bf16.mxu0 0
    %1135 = vmatmul.mubr.bf16.gmra.mrb[0].mxu0 %v1097
    %v1136 = vpop.f32.mrb[0].mxu0
    %v1137 = vadd.f32 0.0, %v1136
    %v1138 = vpop.f32.mrb[0].mxu0
    %v1139 = vpop.f32.mrb[0].mxu0
    %v1140 = vpop.f32.mrb[0].mxu0
    %1141 = vdwg.mxu0
    %v1142 = vsel %vm103, %v815, 0.0
    %v1143 = vsel %vm103, %v907, 0.0
    %v1144 = vadd.f32 %v1142, %v1143
    %v1145 = vsel %vm103, %v999, 0.0
    %v1146 = vadd.f32 %v1144, %v1145
    %v1147 = vsel %vm103, %v1091, 0.0
    %v1148 = vadd.f32 %v1146, %v1147
    %v1149 = vsel %vm103, %v861, 0.0
    %v1150 = vsel %vm103, %v953, 0.0
    %v1151 = vadd.f32 %v1149, %v1150
    %v1152 = vsel %vm103, %v1045, 0.0
    %v1153 = vadd.f32 %v1151, %v1152
    %v1154 = vsel %vm103, %v1137, 0.0
    %v1155 = vadd.f32 %v1153, %v1154
    %v1156 = vpack.c.bf16 %v1155, %v1148
    %1157 = vrot.lane.b32.xlu0 %v99, 32
    %v1158 = vpop.permute.xlu0 %1157
    %1159 = vrot.lane.b32.xlu0 %v100, 32
    %v1160 = vpop.permute.xlu0 %1159
    %1163 = vrot.lane.b32.xlu0 %v174, 32
    %v1164 = vpop.permute.xlu0 %1163
    %v1167 = vsel %vm103, %v1156, 0
    %1169 = vmatprep.subr.bf16.mxu0 0
    %1170 = vmatpush1.bf16.msra.mxu0 %v1158
    %1171 = vmatprep.subr.bf16.mxu0 0
    %1172 = vmatpush1.bf16.msra.mxu0 %v1160
    %1173 = vmatprep.subr.bf16.mxu0 0
    %1174 = vmatpush1.bf16.msra.mxu0 0
    %1175 = vmatprep.subr.bf16.mxu0 0
    %1176 = vmatpush1.bf16.msra.mxu0 0
    %1177 = vmatprep.subr.bf16.mxu0 0
    %1178 = vmatpush1.bf16.msra.mxu0 0
    %1179 = vmatprep.subr.bf16.mxu0 0
    %1180 = vmatpush1.bf16.msra.mxu0 0
    %1181 = vmatprep.subr.bf16.mxu0 0
    %1182 = vmatpush1.bf16.msra.mxu0 0
    %1183 = vmatprep.subr.bf16.mxu0 0
    %1184 = vmatpush1.bf16.msra.mxu0 0
    %1185 = vmatprep.subr.bf16.mxu0 0
    %1186 = vmatpush1.bf16.msra.mxu0 0
    %1187 = vmatprep.subr.bf16.mxu0 0
    %1188 = vmatpush1.bf16.msra.mxu0 0
    %1189 = vmatprep.subr.bf16.mxu0 0
    %1190 = vmatpush1.bf16.msra.mxu0 0
    %1191 = vmatprep.subr.bf16.mxu0 0
    %1192 = vmatpush1.bf16.msra.mxu0 0
    %1193 = vmatprep.subr.bf16.mxu0 0
    %1194 = vmatpush1.bf16.msra.mxu0 0
    %1195 = vmatprep.subr.bf16.mxu0 0
    %1196 = vmatpush1.bf16.msra.mxu0 0
    %1197 = vmatprep.subr.bf16.mxu0 0
    %1198 = vmatpush1.bf16.msra.mxu0 0
    %1199 = vmatprep.subr.bf16.mxu0 0
    %1200 = vmatpush1.bf16.msra.mxu0 0
    %1201 = vmatprep.mubr.bf16.mxu0 0
    %1202 = vmatmul.mubr.bf16.gmra.mrb[0].mxu0 %v1167
    %v1203 = vpop.f32.mrb[0].mxu0
    %v1204 = vadd.f32 %v1164, %v1203
    %v1205 = vpop.f32.mrb[0].mxu0
    %v1206 = vpop.f32.mrb[0].mxu0
    %v1207 = vadd.f32 %v1164, %v1206
    %v1208 = vpop.f32.mrb[0].mxu0
    %1209 = vdwg.mxu0
    %1210 = vst.msk [vmem:[#allocation10] sm:$0xff] %vm103, %v1204
    %1211 = vst.msk [vmem:[#allocation10 + $0x8] sm:$0xff] %vm103, %v1207
    // Predicated region
    $region38: #{tpu_custom_call.1} parent=1 // pred_check
      _
    $region39: #{tpu_custom_call.1} parent=1 // pred_check_branch
      %1213 = sbr.rel (0) target = $region41
    $region40: #{tpu_custom_call.1} parent=1 // pred_region
      %s1215 = ssub.s32 256, 256
      %1216 = vsyncadd [#allocation4], %s1215
      %s1217 = sshll.u32 [#allocation10], 4
      %s1218 = int_to_ptr.vmem [resolvable:$true] %s1217
      %1223 = dma.vmem_to_hbm [thread:$0]  %s1218, 256, %s5, [#allocation4], 128, 128, 8
    $region41: #{tpu_custom_call.1} parent=1 // pred_fallthru
      _
    // Predicated region
    $region42: #{tpu_custom_call.1} parent=1 // pred_check
      _
    $region43: #{tpu_custom_call.1} parent=1 // pred_check_branch
      %1225 = sbr.rel (0) target = $region45
    $region44: #{tpu_custom_call.1} parent=1 // pred_region
      %1226 = dma.done [#allocation4], 256
    $region45: #{tpu_custom_call.1} parent=1 // pred_fallthru
      _
    %1227 = vsyncpa [#allocation3], 1
    %1228 = vsyncpa [#allocation6], 1
    %1229 = vsyncpa [#allocation9], 1
    %1230 = vsyncpa [#allocation4], 1

</llo_original>
